<compile_context>
chip_gen: v6e
topology: v6e:2x2x1
jax: 0.10.0
libtpu: 0.0.40
codegen_flags: <defaults>
</compile_context>

<pallas_src>
import jax
import jax.numpy as jnp
from jax.experimental import pallas as pl
from jax.experimental.pallas import tpu as pltpu


def _round_up(x, m):
    return (x + m - 1) // m * m


def _decoder_seq_kernel(tok_ref,               # SMEM (T,) int32 token ids (scalar prefetch)
                        emb_ref,               # (1, 1, Hp) gathered embedding row
                        h0_ref, c0_ref,        # (1, Hp) initial hidden / cell state
                        w_lstm_ref,            # (2Hp, 4Hp) fused [W_ih; W_hh]^T, 128-aligned gates
                        b_lstm_ref,            # (1, 4Hp) fused bias (b_ih + b_hh)
                        w_out_ref, b_out_ref,  # (Hp, Vp), (1, Vp) output projection
                        logp_ref,              # (1, 1, Vp) per-step log-probs
                        h_out_ref, c_out_ref): # (1, Hp) carried state / final output
    Hp = h0_ref.shape[-1]
    t = pl.program_id(0)

    # seed the carried state on the first step; the output blocks have a constant
    # block index so they stay VMEM-resident across the whole time grid.
    @pl.when(t == 0)
    def _():
        h_out_ref[...] = h0_ref[...]
        c_out_ref[...] = c0_ref[...]

    # embedding row was gathered by the index_map; just ReLU it.
    x = jnp.maximum(emb_ref[0], 0.0)                               # (1, Hp)
    h_prev = h_out_ref[...]
    c_prev = c_out_ref[...]

    # fused LSTMCell: one MXU push, one bias add.  Gate chunks i, f, g, o each
    # occupy a 128-lane-aligned Hp-wide slice.
    xh = jnp.concatenate([x, h_prev], axis=-1)                     # (1, 2Hp)
    gates = jnp.dot(xh, w_lstm_ref[...],
                    preferred_element_type=jnp.float32) + b_lstm_ref[...]   # (1, 4Hp)

    i_g = jax.nn.sigmoid(gates[:, 0 * Hp:1 * Hp])
    f_g = jax.nn.sigmoid(gates[:, 1 * Hp:2 * Hp])
    g_g = jnp.tanh(gates[:, 2 * Hp:3 * Hp])
    o_g = jax.nn.sigmoid(gates[:, 3 * Hp:4 * Hp])

    c_new = f_g * c_prev + i_g * g_g
    h_new = o_g * jnp.tanh(c_new)
    h_out_ref[...] = h_new
    c_out_ref[...] = c_new

    # Output projection consumes the ReLU'd embedding (output[0]) — exactly as in
    # the PyTorch module (the fresh LSTM hidden state is NOT used for the logits).
    # Padded vocab columns have a -1e30 bias so they contribute nothing below.
    logits = jnp.dot(x, w_out_ref[...],
                     preferred_element_type=jnp.float32) + b_out_ref[...]   # (1, Vp)

    # log-softmax over the vocabulary
    m = jnp.max(logits, axis=-1, keepdims=True)
    z = logits - m
    lse = jnp.log(jnp.sum(jnp.exp(z), axis=-1, keepdims=True))
    logp_ref[0] = z - lse


def prepare_params(params):
    """One-time conversion of PyTorch-layout params into the padded launch layout."""
    emb = params["embedding"]                       # (V, H)
    V, H = emb.shape
    Hp = _round_up(H, 128)
    Vp = _round_up(V, 128)

    w_ih, w_hh = params["w_ih"], params["w_hh"]     # (4H, H) each
    b = params["b_ih"] + params["b_hh"]             # (4H,) pre-summed bias

    # fused, transposed, 128-aligned LSTM weight: rows [0:Hp) consume x, rows
    # [Hp:2Hp) consume h; gate g occupies columns [g*Hp, g*Hp+H).
    w_lstm = jnp.zeros((2 * Hp, 4 * Hp), jnp.float32)
    b_lstm = jnp.zeros((1, 4 * Hp), jnp.float32)
    for g in range(4):
        w_lstm = w_lstm.at[:H, g * Hp:g * Hp + H].set(w_ih[g * H:(g + 1) * H, :].T)
        w_lstm = w_lstm.at[Hp:Hp + H, g * Hp:g * Hp + H].set(w_hh[g * H:(g + 1) * H, :].T)
        b_lstm = b_lstm.at[0, g * Hp:g * Hp + H].set(b[g * H:(g + 1) * H])

    # (V, 1, Hp) so the gathered block (1, 1, Hp) has full-extent last two dims.
    emb_p = jnp.zeros((V, 1, Hp), jnp.float32).at[:, 0, :H].set(emb)

    w_out = jnp.zeros((Hp, Vp), jnp.float32).at[:H, :V].set(params["w_out"].T)
    b_out = jnp.full((1, Vp), -1e30, jnp.float32).at[0, :V].set(params["b_out"])

    return dict(H=H, Hp=Hp, V=V, Vp=Vp, emb=emb_p,
                w_lstm=w_lstm, b_lstm=b_lstm, w_out=w_out, b_out=b_out)


def decoder_forward_seq(tokens, hidden, prep):
    """Run T decoder steps in ONE pallas_call (weights stay VMEM-resident).

    tokens: (T,) int32 token ids; hidden: (h, c), each (1, H) unpadded.
    Returns (logp (T, V), (h_T (1, H), c_T (1, H))).
    """
    h, c = hidden
    H, Hp, V, Vp = prep["H"], prep["Hp"], prep["V"], prep["Vp"]
    tokens = jnp.clip(jnp.asarray(tokens, jnp.int32), 0, V - 1)   # guard OOB gather
    T = tokens.shape[0]

    h_p = jnp.zeros((1, Hp), jnp.float32).at[:, :H].set(h)
    c_p = jnp.zeros((1, Hp), jnp.float32).at[:, :H].set(c)

    grid_spec = pltpu.PrefetchScalarGridSpec(
        num_scalar_prefetch=1,
        grid=(T,),
        in_specs=[
            # gather exactly one embedding row per step via the prefetched token id
            pl.BlockSpec((1, 1, Hp), lambda t, tok: (tok[t], 0, 0)),
            pl.BlockSpec((1, Hp), lambda t, tok: (0, 0)),            # h0
            pl.BlockSpec((1, Hp), lambda t, tok: (0, 0)),            # c0
            pl.BlockSpec((2 * Hp, 4 * Hp), lambda t, tok: (0, 0)),   # fused LSTM W (resident)
            pl.BlockSpec((1, 4 * Hp), lambda t, tok: (0, 0)),        # fused LSTM bias
            pl.BlockSpec((Hp, Vp), lambda t, tok: (0, 0)),           # W_out^T (resident)
            pl.BlockSpec((1, Vp), lambda t, tok: (0, 0)),            # b_out (padded = -1e30)
        ],
        out_specs=[
            pl.BlockSpec((1, 1, Vp), lambda t, tok: (t, 0, 0)),      # per-step log-probs
            pl.BlockSpec((1, Hp), lambda t, tok: (0, 0)),            # h carry / final
            pl.BlockSpec((1, Hp), lambda t, tok: (0, 0)),            # c carry / final
        ],
    )

    # generous-but-bounded scoped VMEM: resident weights + small per-step rows,
    # with headroom for double buffering.
    resident_bytes = 4 * (2 * Hp * 4 * Hp + 4 * Hp + Hp * Vp + Vp)
    per_step_bytes = 4 * (Hp + Vp + 4 * Hp)
    vmem_limit = int(min(64 << 20, max(16 << 20, 4 * (resident_bytes + per_step_bytes))))

    logp, h_new, c_new = pl.pallas_call(
        _decoder_seq_kernel,
        out_shape=(jax.ShapeDtypeStruct((T, 1, Vp), jnp.float32),
                   jax.ShapeDtypeStruct((1, Hp), jnp.float32),
                   jax.ShapeDtypeStruct((1, Hp), jnp.float32)),
        grid_spec=grid_spec,
        compiler_params=pltpu.CompilerParams(
            dimension_semantics=("arbitrary",),      # time steps carry state -> sequential
            vmem_limit_bytes=vmem_limit),
    )(tokens, prep["emb"], h_p, c_p,
      prep["w_lstm"], prep["b_lstm"], prep["w_out"], prep["b_out"])

    return logp[:, 0, :V], (h_new[:, :H], c_new[:, :H])


def decoder_forward(token, hidden, prep):
    """Single decoder step (exact PyTorch module interface): token id + (h, c)."""
    logp_seq, (h1, c1) = decoder_forward_seq(jnp.asarray([token], jnp.int32), hidden, prep)
    return logp_seq[0], (h1, c1)


def init_params(key, hidden_size, output_size):
    ks = jax.random.split(key, 7)
    s = 1.0 / float(hidden_size) ** 0.5
    return dict(
        embedding=jax.random.normal(ks[0], (output_size, hidden_size), jnp.float32),
        w_ih=jax.random.uniform(ks[1], (4 * hidden_size, hidden_size), jnp.float32, -s, s),
        w_hh=jax.random.uniform(ks[2], (4 * hidden_size, hidden_size), jnp.float32, -s, s),
        b_ih=jax.random.uniform(ks[3], (4 * hidden_size,), jnp.float32, -s, s),
        b_hh=jax.random.uniform(ks[4], (4 * hidden_size,), jnp.float32, -s, s),
        w_out=jax.random.uniform(ks[5], (output_size, hidden_size), jnp.float32, -s, s),
        b_out=jax.random.uniform(ks[6], (output_size,), jnp.float32, -s, s),
    )


def decoder_forward_ref(token, hidden, params):
    """Pure-JAX reference matching the PyTorch module exactly."""
    h, c = hidden
    x = jnp.maximum(params["embedding"][token], 0.0).reshape(1, -1)
    gates = (x @ params["w_ih"].T + params["b_ih"]
             + h @ params["w_hh"].T + params["b_hh"])
    i_g, f_g, g_g, o_g = jnp.split(gates, 4, axis=-1)
    c_new = jax.nn.sigmoid(f_g) * c + jax.nn.sigmoid(i_g) * jnp.tanh(g_g)
    h_new = jax.nn.sigmoid(o_g) * jnp.tanh(c_new)
    logits = x[0] @ params["w_out"].T + params["b_out"]
    logp = jax.nn.log_softmax(logits, axis=0)
    return logp, (h_new, c_new)


if __name__ == "__main__":
    hidden_size = 32
    output_size = 64   # vocabulary size

    key = jax.random.PRNGKey(0)
    kp, kh, kc, kt = jax.random.split(key, 4)
    params = init_params(kp, hidden_size, output_size)
    prep = prepare_params(params)          # one-time layout conversion (no per-call .T)

    h0 = jax.random.normal(kh, (1, hidden_size), jnp.float32)
    c0 = jax.random.normal(kc, (1, hidden_size), jnp.float32)

    # --- single step: exact module forward(input, hidden) ---
    token = 5
    logp, (h1, c1) = decoder_forward(token, (h0, c0), prep)
    jax.block_until_ready((logp, h1, c1))

    logp_r, (h1_r, c1_r) = decoder_forward_ref(token, (h0, c0), params)
    assert jnp.allclose(logp, logp_r, atol=1e-5, rtol=1e-5)
    assert jnp.allclose(h1, h1_r, atol=1e-5, rtol=1e-5)
    assert jnp.allclose(c1, c1_r, atol=1e-5, rtol=1e-5)

    # --- multi-step decode: T steps in one kernel, weights stay VMEM-resident ---
    T = 6
    tokens = jax.random.randint(kt, (T,), 0, output_size, dtype=jnp.int32)
    logp_seq, (hT, cT) = decoder_forward_seq(tokens, (h0, c0), prep)
    jax.block_until_ready((logp_seq, hT, cT))

    h_r, c_r = h0, c0
    for t in range(T):
        logp_t_r, (h_r, c_r) = decoder_forward_ref(int(tokens[t]), (h_r, c_r), params)
        assert jnp.allclose(logp_seq[t], logp_t_r, atol=1e-5, rtol=1e-5)
    assert jnp.allclose(hT, h_r, atol=1e-5, rtol=1e-5)
    assert jnp.allclose(cT, c_r, atol=1e-5, rtol=1e-5)

    print("KERNEL_OK")
</pallas_src>

<mosaic_0001>
module attributes {stable_mosaic.version = 11 : i64} {
  func.func @_decoder_seq_kernel(%arg0: i32, %arg1: memref<1xi32, #tpu.memory_space<smem>>, %arg2: memref<1x1x128xf32, #tpu.memory_space<vmem>>, %arg3: memref<1x128xf32, #tpu.memory_space<vmem>>, %arg4: memref<1x128xf32, #tpu.memory_space<vmem>>, %arg5: memref<256x512xf32, #tpu.memory_space<vmem>>, %arg6: memref<1x512xf32, #tpu.memory_space<vmem>>, %arg7: memref<128x128xf32, #tpu.memory_space<vmem>>, %arg8: memref<1x128xf32, #tpu.memory_space<vmem>>, %arg9: memref<1x1x128xf32, #tpu.memory_space<vmem>>, %arg10: memref<1x128xf32, #tpu.memory_space<vmem>>, %arg11: memref<1x128xf32, #tpu.memory_space<vmem>>) attributes {dimension_semantics = [#tpu.dimension_semantics<arbitrary>], iteration_bounds = array<i64: 1>, scalar_prefetch = 1 : i64, scratch_operands = 0 : i64, tpu.core_type = #tpu.core_type<tc>, window_params = [{transform_indices = @transform_0, window_bounds = array<i64: 1, 1, 128>}, {pipeline_mode = #tpu.pipeline_mode<synchronous>, transform_indices = @transform_1, window_bounds = array<i64: 1, 128>}, {pipeline_mode = #tpu.pipeline_mode<synchronous>, transform_indices = @transform_2, window_bounds = array<i64: 1, 128>}, {pipeline_mode = #tpu.pipeline_mode<synchronous>, transform_indices = @transform_3, window_bounds = array<i64: 256, 512>}, {pipeline_mode = #tpu.pipeline_mode<synchronous>, transform_indices = @transform_4, window_bounds = array<i64: 1, 512>}, {pipeline_mode = #tpu.pipeline_mode<synchronous>, transform_indices = @transform_5, window_bounds = array<i64: 128, 128>}, {pipeline_mode = #tpu.pipeline_mode<synchronous>, transform_indices = @transform_6, window_bounds = array<i64: 1, 128>}, {transform_indices = @transform_7, window_bounds = array<i64: 1, 1, 128>}, {pipeline_mode = #tpu.pipeline_mode<synchronous>, transform_indices = @transform_8, window_bounds = array<i64: 1, 128>}, {pipeline_mode = #tpu.pipeline_mode<synchronous>, transform_indices = @transform_9, window_bounds = array<i64: 1, 128>}]} {
    %c0_i32 = arith.constant 0 : i32
    %0 = arith.cmpi eq, %arg0, %c0_i32 : i32
    %1 = arith.extui %0 : i1 to i32
    %c0_i32_0 = arith.constant 0 : i32
    %2 = arith.cmpi ne, %1, %c0_i32_0 : i32
    scf.if %2 {
      %c0_29 = arith.constant 0 : index
      %c0_30 = arith.constant 0 : index
      %58 = vector.load %arg3[%c0_29, %c0_30] : memref<1x128xf32, #tpu.memory_space<vmem>>, vector<1x128xf32>
      %c0_31 = arith.constant 0 : index
      %c0_32 = arith.constant 0 : index
      %59 = vector.load %arg10[%c0_31, %c0_32] : memref<1x128xf32, #tpu.memory_space<vmem>>, vector<1x128xf32>
      tpu.vector_store %arg10[%c0_31, %c0_32], %58 {strides = array<i32>} : memref<1x128xf32, #tpu.memory_space<vmem>>, vector<1x128xf32>,
      %c0_33 = arith.constant 0 : index
      %c0_34 = arith.constant 0 : index
      %60 = vector.load %arg4[%c0_33, %c0_34] : memref<1x128xf32, #tpu.memory_space<vmem>>, vector<1x128xf32>
      %c0_35 = arith.constant 0 : index
      %c0_36 = arith.constant 0 : index
      %61 = vector.load %arg11[%c0_35, %c0_36] : memref<1x128xf32, #tpu.memory_space<vmem>>, vector<1x128xf32>
      tpu.vector_store %arg11[%c0_35, %c0_36], %60 {strides = array<i32>} : memref<1x128xf32, #tpu.memory_space<vmem>>, vector<1x128xf32>,
    } else {
    }
    %c0 = arith.constant 0 : index
    %c0_1 = arith.constant 0 : index
    %c0_2 = arith.constant 0 : index
    %3 = vector.load %arg2[%c0, %c0_1, %c0_2] : memref<1x1x128xf32, #tpu.memory_space<vmem>>, vector<1x1x128xf32>
    %4 = vector.shape_cast %3 : vector<1x1x128xf32> to vector<1x128xf32>
    %cst = arith.constant 0.000000e+00 : f32
    %5 = vector.broadcast %cst : f32 to vector<1x128xf32>
    %6 = arith.maximumf %4, %5 : vector<1x128xf32>
    %c0_3 = arith.constant 0 : index
    %c0_4 = arith.constant 0 : index
    %7 = vector.load %arg10[%c0_3, %c0_4] : memref<1x128xf32, #tpu.memory_space<vmem>>, vector<1x128xf32>
    %c0_5 = arith.constant 0 : index
    %c0_6 = arith.constant 0 : index
    %8 = vector.load %arg11[%c0_5, %c0_6] : memref<1x128xf32, #tpu.memory_space<vmem>>, vector<1x128xf32>
    %9 = tpu.concatenate %6, %7 in 1 : vector<1x128xf32>, vector<1x128xf32> -> vector<1x256xf32>
    %c0_7 = arith.constant 0 : index
    %c0_8 = arith.constant 0 : index
    %10 = vector.load %arg5[%c0_7, %c0_8] : memref<256x512xf32, #tpu.memory_space<vmem>>, vector<256x512xf32>
    %cst_9 = arith.constant dense<0.000000e+00> : vector<1x512xf32>
    %11 = tpu.matmul %9, %10, %cst_9 {dimension_numbers = #tpu.dot_dimension_numbers<[1], [0], [0], [1], [0, 0, 1, 1], [], []>} : vector<1x256xf32>, vector<256x512xf32>, vector<1x512xf32> -> vector<1x512xf32>
    %c0_10 = arith.constant 0 : index
    %c0_11 = arith.constant 0 : index
    %12 = vector.load %arg6[%c0_10, %c0_11] : memref<1x512xf32, #tpu.memory_space<vmem>>, vector<1x512xf32>
    %13 = arith.addf %11, %12 : vector<1x512xf32>
    %14 = vector.extract_strided_slice %13 {offsets = [0, 0], sizes = [1, 128], strides = [1, 1]} : vector<1x512xf32> to vector<1x128xf32>
    %15 = arith.negf %14 : vector<1x128xf32>
    %16 = math.exp %15 : vector<1x128xf32>
    %cst_12 = arith.constant 1.000000e+00 : f32
    %17 = vector.broadcast %cst_12 : f32 to vector<1x128xf32>
    %18 = arith.addf %17, %16 : vector<1x128xf32>
    %19 = arith.divf %17, %18 : vector<1x128xf32>
    %20 = vector.extract_strided_slice %13 {offsets = [0, 128], sizes = [1, 128], strides = [1, 1]} : vector<1x512xf32> to vector<1x128xf32>
    %21 = arith.negf %20 : vector<1x128xf32>
    %22 = math.exp %21 : vector<1x128xf32>
    %cst_13 = arith.constant 1.000000e+00 : f32
    %23 = vector.broadcast %cst_13 : f32 to vector<1x128xf32>
    %24 = arith.addf %23, %22 : vector<1x128xf32>
    %25 = arith.divf %23, %24 : vector<1x128xf32>
    %26 = vector.extract_strided_slice %13 {offsets = [0, 256], sizes = [1, 128], strides = [1, 1]} : vector<1x512xf32> to vector<1x128xf32>
    %27 = math.tanh %26 : vector<1x128xf32>
    %28 = vector.extract_strided_slice %13 {offsets = [0, 384], sizes = [1, 128], strides = [1, 1]} : vector<1x512xf32> to vector<1x128xf32>
    %29 = arith.negf %28 : vector<1x128xf32>
    %30 = math.exp %29 : vector<1x128xf32>
    %cst_14 = arith.constant 1.000000e+00 : f32
    %31 = vector.broadcast %cst_14 : f32 to vector<1x128xf32>
    %32 = arith.addf %31, %30 : vector<1x128xf32>
    %33 = arith.divf %31, %32 : vector<1x128xf32>
    %34 = arith.mulf %25, %8 : vector<1x128xf32>
    %35 = arith.mulf %19, %27 : vector<1x128xf32>
    %36 = arith.addf %34, %35 : vector<1x128xf32>
    %37 = math.tanh %36 : vector<1x128xf32>
    %38 = arith.mulf %33, %37 : vector<1x128xf32>
    %c0_15 = arith.constant 0 : index
    %c0_16 = arith.constant 0 : index
    %39 = vector.load %arg10[%c0_15, %c0_16] : memref<1x128xf32, #tpu.memory_space<vmem>>, vector<1x128xf32>
    tpu.vector_store %arg10[%c0_15, %c0_16], %38 {strides = array<i32>} : memref<1x128xf32, #tpu.memory_space<vmem>>, vector<1x128xf32>,
    %c0_17 = arith.constant 0 : index
    %c0_18 = arith.constant 0 : index
    %40 = vector.load %arg11[%c0_17, %c0_18] : memref<1x128xf32, #tpu.memory_space<vmem>>, vector<1x128xf32>
    tpu.vector_store %arg11[%c0_17, %c0_18], %36 {strides = array<i32>} : memref<1x128xf32, #tpu.memory_space<vmem>>, vector<1x128xf32>,
    %c0_19 = arith.constant 0 : index
    %c0_20 = arith.constant 0 : index
    %41 = vector.load %arg7[%c0_19, %c0_20] : memref<128x128xf32, #tpu.memory_space<vmem>>, vector<128x128xf32>
    %cst_21 = arith.constant dense<0.000000e+00> : vector<1x128xf32>
    %42 = tpu.matmul %6, %41, %cst_21 {dimension_numbers = #tpu.dot_dimension_numbers<[1], [0], [0], [1], [0, 0, 1, 1], [], []>} : vector<1x128xf32>, vector<128x128xf32>, vector<1x128xf32> -> vector<1x128xf32>
    %c0_22 = arith.constant 0 : index
    %c0_23 = arith.constant 0 : index
    %43 = vector.load %arg8[%c0_22, %c0_23] : memref<1x128xf32, #tpu.memory_space<vmem>>, vector<1x128xf32>
    %44 = arith.addf %42, %43 : vector<1x128xf32>
    %cst_24 = arith.constant dense<0xFF800000> : vector<1xf32>
    %45 = vector.multi_reduction <maximumf>, %44, %cst_24 [1] : vector<1x128xf32> to vector<1xf32>
    %46 = vector.shape_cast %45 : vector<1xf32> to vector<1x1xf32>
    %47 = vector.broadcast %46 : vector<1x1xf32> to vector<1x128xf32>
    %48 = arith.subf %44, %47 : vector<1x128xf32>
    %49 = math.exp %48 : vector<1x128xf32>
    %cst_25 = arith.constant dense<0.000000e+00> : vector<1xf32>
    %50 = vector.multi_reduction <add>, %49, %cst_25 [1] : vector<1x128xf32> to vector<1xf32>
    %51 = vector.shape_cast %50 : vector<1xf32> to vector<1x1xf32>
    %52 = math.log %51 : vector<1x1xf32>
    %53 = vector.broadcast %52 : vector<1x1xf32> to vector<1x128xf32>
    %54 = arith.subf %48, %53 : vector<1x128xf32>
    %c0_26 = arith.constant 0 : index
    %c0_27 = arith.constant 0 : index
    %c0_28 = arith.constant 0 : index
    %55 = vector.load %arg9[%c0_26, %c0_27, %c0_28] : memref<1x1x128xf32, #tpu.memory_space<vmem>>, vector<1x1x128xf32>
    %56 = vector.shape_cast %55 : vector<1x1x128xf32> to vector<1x128xf32>
    %57 = vector.shape_cast %54 : vector<1x128xf32> to vector<1x1x128xf32>
    tpu.vector_store %arg9[%c0_26, %c0_27, %c0_28], %57 {strides = array<i32>} : memref<1x1x128xf32, #tpu.memory_space<vmem>>, vector<1x1x128xf32>,
    return
  }
  func.func @transform_0(%arg0: i32, %arg1: memref<1xi32, #tpu.memory_space<smem>>) -> (i32, i32, i32) {
    %0 = arith.index_cast %arg0 : i32 to index
    %1 = memref.load %arg1[%0] : memref<1xi32, #tpu.memory_space<smem>>
    %c0_i32 = arith.constant 0 : i32
    %c0_i32_0 = arith.constant 0 : i32
    %c0_i32_1 = arith.constant 0 : i32
    return %1, %c0_i32, %c0_i32_0 : i32, i32, i32
  }
  func.func @transform_1(%arg0: i32, %arg1: memref<1xi32, #tpu.memory_space<smem>>) -> (i32, i32) {
    %c0_i32 = arith.constant 0 : i32
    %c0_i32_0 = arith.constant 0 : i32
    %c0_i32_1 = arith.constant 0 : i32
    return %c0_i32, %c0_i32_0 : i32, i32
  }
  func.func @transform_2(%arg0: i32, %arg1: memref<1xi32, #tpu.memory_space<smem>>) -> (i32, i32) {
    %c0_i32 = arith.constant 0 : i32
    %c0_i32_0 = arith.constant 0 : i32
    %c0_i32_1 = arith.constant 0 : i32
    return %c0_i32, %c0_i32_0 : i32, i32
  }
  func.func @transform_3(%arg0: i32, %arg1: memref<1xi32, #tpu.memory_space<smem>>) -> (i32, i32) {
    %c0_i32 = arith.constant 0 : i32
    %c0_i32_0 = arith.constant 0 : i32
    %c0_i32_1 = arith.constant 0 : i32
    return %c0_i32, %c0_i32_0 : i32, i32
  }
  func.func @transform_4(%arg0: i32, %arg1: memref<1xi32, #tpu.memory_space<smem>>) -> (i32, i32) {
    %c0_i32 = arith.constant 0 : i32
    %c0_i32_0 = arith.constant 0 : i32
    %c0_i32_1 = arith.constant 0 : i32
    return %c0_i32, %c0_i32_0 : i32, i32
  }
  func.func @transform_5(%arg0: i32, %arg1: memref<1xi32, #tpu.memory_space<smem>>) -> (i32, i32) {
    %c0_i32 = arith.constant 0 : i32
    %c0_i32_0 = arith.constant 0 : i32
    %c0_i32_1 = arith.constant 0 : i32
    return %c0_i32, %c0_i32_0 : i32, i32
  }
  func.func @transform_6(%arg0: i32, %arg1: memref<1xi32, #tpu.memory_space<smem>>) -> (i32, i32) {
    %c0_i32 = arith.constant 0 : i32
    %c0_i32_0 = arith.constant 0 : i32
    %c0_i32_1 = arith.constant 0 : i32
    return %c0_i32, %c0_i32_0 : i32, i32
  }
  func.func @transform_7(%arg0: i32, %arg1: memref<1xi32, #tpu.memory_space<smem>>) -> (i32, i32, i32) {
    %c0_i32 = arith.constant 0 : i32
    %c0_i32_0 = arith.constant 0 : i32
    %c0_i32_1 = arith.constant 0 : i32
    return %arg0, %c0_i32, %c0_i32_0 : i32, i32, i32
  }
  func.func @transform_8(%arg0: i32, %arg1: memref<1xi32, #tpu.memory_space<smem>>) -> (i32, i32) {
    %c0_i32 = arith.constant 0 : i32
    %c0_i32_0 = arith.constant 0 : i32
    %c0_i32_1 = arith.constant 0 : i32
    return %c0_i32, %c0_i32_0 : i32, i32
  }
  func.func @transform_9(%arg0: i32, %arg1: memref<1xi32, #tpu.memory_space<smem>>) -> (i32, i32) {
    %c0_i32 = arith.constant 0 : i32
    %c0_i32_0 = arith.constant 0 : i32
    %c0_i32_1 = arith.constant 0 : i32
    return %c0_i32, %c0_i32_0 : i32, i32
  }
}

</mosaic_0001>

<llo_original>
// kernel: tpu_custom_call.1
$region0: #{tpu_custom_call.1}
  #allocation0 [shape = 'u32[]', space=smem, size = 0x4, offset = 0x4, fixed_abs, tag = 'smem constant byte address 0x4 - core index']
  #allocation1 [shape = 'u32[144,128]{1,0:T(1,128)}', space=vmem, size = 0x12000, scoped, tag = 'internal scratch']
  #allocation2 [shape = 's32[1]{0}', space=sflag, size = 0x4, scoped, tag = 'scoped memory for tpu_custom_call.1']
  #allocation3 [shape = 's32[1]{0:T(128)S(6)}', space=smem, size = 0x200, scoped, tag = 'prefetched SMEM operand 0']
  %s0 = inlined_call_operand.<no memory space> [shape: s32[1], index: 0, kind: input, shape index: {}]
  %s1 = inlined_call_operand.hbm [shape: f32[64,1,128], index: 1, kind: input, shape index: {}]
  %s2 = inlined_call_operand.vmem [shape: f32[1,128], index: 2, kind: input, shape index: {}]
  %s3 = inlined_call_operand.vmem [shape: f32[1,128], index: 3, kind: input, shape index: {}]
  %s4 = inlined_call_operand.hbm [shape: f32[256,512], index: 4, kind: input, shape index: {}]
  %s5 = inlined_call_operand.vmem [shape: f32[1,512], index: 5, kind: input, shape index: {}]
  %s6 = inlined_call_operand.hbm [shape: f32[128,128], index: 6, kind: input, shape index: {}]
  %s7 = inlined_call_operand.vmem [shape: f32[1,128], index: 7, kind: input, shape index: {}]
  %s8 = inlined_call_operand.hbm [shape: f32[1,1,128], index: 8, kind: output, shape index: {0}]
  %s9 = inlined_call_operand.hbm [shape: f32[1,128], index: 9, kind: output, shape index: {1}]
  %s10 = inlined_call_operand.hbm [shape: f32[1,128], index: 10, kind: output, shape index: {2}]
  %11 = xla_tuple %s8, %s9, %s10
  %s12 = sld [smem:[#allocation0]]
  $region70: #{tpu_custom_call.1} parent=0
    _
  %s14 = ssub.s32 1, %s12
  %s15 = scalar_select 0, %s14, %s12
  %16 = sst [smem:[#allocation3]] %s0
  $region1: #{tpu_custom_call.1} parent=0
    #allocation4 [shape = 'u8[512]{0}', space=vmem, size = 0x400, scoped, tag = 'input window, operand 1, single buffered']
    #allocation5 [shape = 's32[1]{0}', space=sflag, size = 0x4, scoped, tag = 'scoped memory for tpu_custom_call.1']
    #allocation6 [shape = 's32[1]{0}', space=sflag, size = 0x4, scoped, tag = 'scoped memory for tpu_custom_call.1']
    #allocation7 [shape = 'u8[524288]{0}', space=vmem, size = 0x80000, scoped, tag = 'input window, operand 4, single buffered']
    #allocation8 [shape = 's32[1]{0}', space=sflag, size = 0x4, scoped, tag = 'scoped memory for tpu_custom_call.1']
    #allocation9 [shape = 'u8[65536]{0}', space=vmem, size = 0x10000, scoped, tag = 'input window, operand 6, single buffered']
    #allocation10 [shape = 'u8[512]{0}', space=vmem, size = 0x400, scoped, tag = 'output window, operand 0, single buffered']
    #allocation11 [shape = 'u8[512]{0}', space=vmem, size = 0x400, scoped, tag = 'output window, operand 1, single buffered']
    #allocation12 [shape = 's32[1]{0}', space=sflag, size = 0x4, scoped, tag = 'scoped memory for tpu_custom_call.1']
    #allocation13 [shape = 'u8[512]{0}', space=vmem, size = 0x400, scoped, tag = 'output window, operand 2, single buffered']
    %17 = vsyncpa [#allocation5], 0
    %18 = vsyncpa [#allocation8], 0
    %19 = vsyncpa [#allocation6], 0
    %20 = vsyncpa [#allocation12], 0
    // Predicated region
    $region2: #{tpu_custom_call.1} parent=1 // pred_check
      _
    $region3: #{tpu_custom_call.1} parent=1 // pred_check_branch
      %22 = sbr.rel (0) target = $region5
    $region4: #{tpu_custom_call.1} parent=1 // pred_region
      %s23 = sld [smem:[#allocation3]]
      %s25 = ssub.s32 16, 16
      %26 = vsyncadd [#allocation5], %s25
      %s27 = smul.addr %s23, 16
      %s28 = scalar_lea.hbm %s1, %s27
      %s30 = sshll.u32 [#allocation4], 4
      %s31 = int_to_ptr.vmem [resolvable:$true] %s30
      %33 = dma.hbm_to_vmem [thread:$0]  %s28, 16, %s31, [#allocation5]
    $region5: #{tpu_custom_call.1} parent=1 // pred_fallthru
      _
    // Predicated region
    $region6: #{tpu_custom_call.1} parent=1 // pred_check
      _
    $region7: #{tpu_custom_call.1} parent=1 // pred_check_branch
      %35 = sbr.rel (0) target = $region9
    $region8: #{tpu_custom_call.1} parent=1 // pred_region
      _
    $region9: #{tpu_custom_call.1} parent=1 // pred_fallthru
      _
    // Predicated region
    $region10: #{tpu_custom_call.1} parent=1 // pred_check
      _
    $region11: #{tpu_custom_call.1} parent=1 // pred_check_branch
      %37 = sbr.rel (0) target = $region13
    $region12: #{tpu_custom_call.1} parent=1 // pred_region
      _
    $region13: #{tpu_custom_call.1} parent=1 // pred_fallthru
      _
    // Predicated region
    $region14: #{tpu_custom_call.1} parent=1 // pred_check
      _
    $region15: #{tpu_custom_call.1} parent=1 // pred_check_branch
      %39 = sbr.rel (0) target = $region17
    $region16: #{tpu_custom_call.1} parent=1 // pred_region
      %s41 = ssub.s32 16384, 16384
      %42 = vsyncadd [#allocation8], %s41
      %s43 = sshll.u32 [#allocation7], 4
      %s44 = int_to_ptr.vmem [resolvable:$true] %s43
      %49 = dma.hbm_to_vmem [thread:$0]  %s4, 16384, %s44, [#allocation8], 512, 512, 32
    $region17: #{tpu_custom_call.1} parent=1 // pred_fallthru
      _
    // Predicated region
    $region18: #{tpu_custom_call.1} parent=1 // pred_check
      _
    $region19: #{tpu_custom_call.1} parent=1 // pred_check_branch
      %51 = sbr.rel (0) target = $region21
    $region20: #{tpu_custom_call.1} parent=1 // pred_region
      _
    $region21: #{tpu_custom_call.1} parent=1 // pred_fallthru
      _
    // Predicated region
    $region22: #{tpu_custom_call.1} parent=1 // pred_check
      _
    $region23: #{tpu_custom_call.1} parent=1 // pred_check_branch
      %53 = sbr.rel (0) target = $region25
    $region24: #{tpu_custom_call.1} parent=1 // pred_region
      %s55 = ssub.s32 2048, 2048
      %56 = vsyncadd [#allocation8], %s55
      %s57 = sshll.u32 [#allocation9], 4
      %s58 = int_to_ptr.vmem [resolvable:$true] %s57
      %63 = dma.hbm_to_vmem [thread:$0]  %s6, 2048, %s58, [#allocation8], 128, 128, 8
    $region25: #{tpu_custom_call.1} parent=1 // pred_fallthru
      _
    // Predicated region
    $region26: #{tpu_custom_call.1} parent=1 // pred_check
      _
    $region27: #{tpu_custom_call.1} parent=1 // pred_check_branch
      %65 = sbr.rel (0) target = $region29
    $region28: #{tpu_custom_call.1} parent=1 // pred_region
      _
    $region29: #{tpu_custom_call.1} parent=1 // pred_fallthru
      _
    // Predicated region
    $region30: #{tpu_custom_call.1} parent=1 // pred_check
      _
    $region31: #{tpu_custom_call.1} parent=1 // pred_check_branch
      %67 = sbr.rel (0) target = $region33
    $region32: #{tpu_custom_call.1} parent=1 // pred_region
      %68 = dma.done [#allocation5], 16
    $region33: #{tpu_custom_call.1} parent=1 // pred_fallthru
      _
    // Predicated region
    $region34: #{tpu_custom_call.1} parent=1 // pred_check
      _
    $region35: #{tpu_custom_call.1} parent=1 // pred_check_branch
      %70 = sbr.rel (0) target = $region37
    $region36: #{tpu_custom_call.1} parent=1 // pred_region
      %71 = dma.done [#allocation8], 16384
    $region37: #{tpu_custom_call.1} parent=1 // pred_fallthru
      _
    // Predicated region
    $region38: #{tpu_custom_call.1} parent=1 // pred_check
      _
    $region39: #{tpu_custom_call.1} parent=1 // pred_check_branch
      %73 = sbr.rel (0) target = $region41
    $region40: #{tpu_custom_call.1} parent=1 // pred_region
      %74 = dma.done [#allocation8], 2048
    $region41: #{tpu_custom_call.1} parent=1 // pred_fallthru
      _
    %s75 = sld [smem:[#allocation3]]
    %p76 = scmp.eq.s32.totalorder 0, 0
    // Predicated region
    $region42: #{tpu_custom_call.1} parent=1 // pred_check
      %p77 = pneg %p76
    $region43: #{tpu_custom_call.1} parent=1 // pred_check_branch
      %79 = sbr.rel (%p77) target = $region45
    $region44: #{tpu_custom_call.1} parent=1 // pred_region
      %v80 = vld [vmem:[%s2] sm:$0x1]
      %81 = vst [vmem:[#allocation11] sm:$0x1] %v80
      %v82 = vld [vmem:[%s3] sm:$0x1]
      %83 = vst [vmem:[#allocation13] sm:$0x1] %v82
    $region45: #{tpu_custom_call.1} parent=1 // pred_fallthru
      _
    %v84 = vld [vmem:[#allocation4] sm:$0x1]
    %v85 = vmax.f32 %v84, 0.0
    %v86 = vld [vmem:[#allocation11] sm:$0x1]
    %v87 = vld [vmem:[#allocation13] sm:$0x1]
    %v88 = vld [vmem:[#allocation7] sm:$0xff]
    %v89 = vld [vmem:[#allocation7 + $0x8] sm:$0xff]
    %v90 = vld [vmem:[#allocation7 + $0x10] sm:$0xff]
    %v91 = vld [vmem:[#allocation7 + $0x18] sm:$0xff]
    %v92 = vld [vmem:[#allocation7 + $0x20] sm:$0xff]
    %v93 = vld [vmem:[#allocation7 + $0x28] sm:$0xff]
    %v94 = vld [vmem:[#allocation7 + $0x30] sm:$0xff]
    %v95 = vld [vmem:[#allocation7 + $0x38] sm:$0xff]
    %v96 = vld [vmem:[#allocation7 + $0x40] sm:$0xff]
    %v97 = vld [vmem:[#allocation7 + $0x48] sm:$0xff]
    %v98 = vld [vmem:[#allocation7 + $0x50] sm:$0xff]
    %v99 = vld [vmem:[#allocation7 + $0x58] sm:$0xff]
    %v100 = vld [vmem:[#allocation7 + $0x60] sm:$0xff]
    %v101 = vld [vmem:[#allocation7 + $0x68] sm:$0xff]
    %v102 = vld [vmem:[#allocation7 + $0x70] sm:$0xff]
    %v103 = vld [vmem:[#allocation7 + $0x78] sm:$0xff]
    %v104 = vld [vmem:[#allocation7 + $0x80] sm:$0xff]
    %v105 = vld [vmem:[#allocation7 + $0x88] sm:$0xff]
    %v106 = vld [vmem:[#allocation7 + $0x90] sm:$0xff]
    %v107 = vld [vmem:[#allocation7 + $0x98] sm:$0xff]
    %v108 = vld [vmem:[#allocation7 + $0xa0] sm:$0xff]
    %v109 = vld [vmem:[#allocation7 + $0xa8] sm:$0xff]
    %v110 = vld [vmem:[#allocation7 + $0xb0] sm:$0xff]
    %v111 = vld [vmem:[#allocation7 + $0xb8] sm:$0xff]
    %v112 = vld [vmem:[#allocation7 + $0xc0] sm:$0xff]
    %v113 = vld [vmem:[#allocation7 + $0xc8] sm:$0xff]
    %v114 = vld [vmem:[#allocation7 + $0xd0] sm:$0xff]
    %v115 = vld [vmem:[#allocation7 + $0xd8] sm:$0xff]
    %v116 = vld [vmem:[#allocation7 + $0xe0] sm:$0xff]
    %v117 = vld [vmem:[#allocation7 + $0xe8] sm:$0xff]
    %v118 = vld [vmem:[#allocation7 + $0xf0] sm:$0xff]
    %v119 = vld [vmem:[#allocation7 + $0xf8] sm:$0xff]
    %v120 = vld [vmem:[#allocation7 + $0x100] sm:$0xff]
    %v121 = vld [vmem:[#allocation7 + $0x108] sm:$0xff]
    %v122 = vld [vmem:[#allocation7 + $0x110] sm:$0xff]
    %v123 = vld [vmem:[#allocation7 + $0x118] sm:$0xff]
    %v124 = vld [vmem:[#allocation7 + $0x120] sm:$0xff]
    %v125 = vld [vmem:[#allocation7 + $0x128] sm:$0xff]
    %v126 = vld [vmem:[#allocation7 + $0x130] sm:$0xff]
    %v127 = vld [vmem:[#allocation7 + $0x138] sm:$0xff]
    %v128 = vld [vmem:[#allocation7 + $0x140] sm:$0xff]
    %v129 = vld [vmem:[#allocation7 + $0x148] sm:$0xff]
    %v130 = vld [vmem:[#allocation7 + $0x150] sm:$0xff]
    %v131 = vld [vmem:[#allocation7 + $0x158] sm:$0xff]
    %v132 = vld [vmem:[#allocation7 + $0x160] sm:$0xff]
    %v133 = vld [vmem:[#allocation7 + $0x168] sm:$0xff]
    %v134 = vld [vmem:[#allocation7 + $0x170] sm:$0xff]
    %v135 = vld [vmem:[#allocation7 + $0x178] sm:$0xff]
    %v136 = vld [vmem:[#allocation7 + $0x180] sm:$0xff]
    %v137 = vld [vmem:[#allocation7 + $0x188] sm:$0xff]
    %v138 = vld [vmem:[#allocation7 + $0x190] sm:$0xff]
    %v139 = vld [vmem:[#allocation7 + $0x198] sm:$0xff]
    %v140 = vld [vmem:[#allocation7 + $0x1a0] sm:$0xff]
    %v141 = vld [vmem:[#allocation7 + $0x1a8] sm:$0xff]
    %v142 = vld [vmem:[#allocation7 + $0x1b0] sm:$0xff]
    %v143 = vld [vmem:[#allocation7 + $0x1b8] sm:$0xff]
    %v144 = vld [vmem:[#allocation7 + $0x1c0] sm:$0xff]
    %v145 = vld [vmem:[#allocation7 + $0x1c8] sm:$0xff]
    %v146 = vld [vmem:[#allocation7 + $0x1d0] sm:$0xff]
    %v147 = vld [vmem:[#allocation7 + $0x1d8] sm:$0xff]
    %v148 = vld [vmem:[#allocation7 + $0x1e0] sm:$0xff]
    %v149 = vld [vmem:[#allocation7 + $0x1e8] sm:$0xff]
    %v150 = vld [vmem:[#allocation7 + $0x1f0] sm:$0xff]
    %v151 = vld [vmem:[#allocation7 + $0x1f8] sm:$0xff]
    %v152 = vld [vmem:[#allocation7 + $0x200] sm:$0xff]
    %v153 = vld [vmem:[#allocation7 + $0x208] sm:$0xff]
    %v154 = vld [vmem:[#allocation7 + $0x210] sm:$0xff]
    %v155 = vld [vmem:[#allocation7 + $0x218] sm:$0xff]
    %v156 = vld [vmem:[#allocation7 + $0x220] sm:$0xff]
    %v157 = vld [vmem:[#allocation7 + $0x228] sm:$0xff]
    %v158 = vld [vmem:[#allocation7 + $0x230] sm:$0xff]
    %v159 = vld [vmem:[#allocation7 + $0x238] sm:$0xff]
    %v160 = vld [vmem:[#allocation7 + $0x240] sm:$0xff]
    %v161 = vld [vmem:[#allocation7 + $0x248] sm:$0xff]
    %v162 = vld [vmem:[#allocation7 + $0x250] sm:$0xff]
    %v163 = vld [vmem:[#allocation7 + $0x258] sm:$0xff]
    %v164 = vld [vmem:[#allocation7 + $0x260] sm:$0xff]
    %v165 = vld [vmem:[#allocation7 + $0x268] sm:$0xff]
    %v166 = vld [vmem:[#allocation7 + $0x270] sm:$0xff]
    %v167 = vld [vmem:[#allocation7 + $0x278] sm:$0xff]
    %v168 = vld [vmem:[#allocation7 + $0x280] sm:$0xff]
    %v169 = vld [vmem:[#allocation7 + $0x288] sm:$0xff]
    %v170 = vld [vmem:[#allocation7 + $0x290] sm:$0xff]
    %v171 = vld [vmem:[#allocation7 + $0x298] sm:$0xff]
    %v172 = vld [vmem:[#allocation7 + $0x2a0] sm:$0xff]
    %v173 = vld [vmem:[#allocation7 + $0x2a8] sm:$0xff]
    %v174 = vld [vmem:[#allocation7 + $0x2b0] sm:$0xff]
    %v175 = vld [vmem:[#allocation7 + $0x2b8] sm:$0xff]
    %v176 = vld [vmem:[#allocation7 + $0x2c0] sm:$0xff]
    %v177 = vld [vmem:[#allocation7 + $0x2c8] sm:$0xff]
    %v178 = vld [vmem:[#allocation7 + $0x2d0] sm:$0xff]
    %v179 = vld [vmem:[#allocation7 + $0x2d8] sm:$0xff]
    %v180 = vld [vmem:[#allocation7 + $0x2e0] sm:$0xff]
    %v181 = vld [vmem:[#allocation7 + $0x2e8] sm:$0xff]
    %v182 = vld [vmem:[#allocation7 + $0x2f0] sm:$0xff]
    %v183 = vld [vmem:[#allocation7 + $0x2f8] sm:$0xff]
    %v184 = vld [vmem:[#allocation7 + $0x300] sm:$0xff]
    %v185 = vld [vmem:[#allocation7 + $0x308] sm:$0xff]
    %v186 = vld [vmem:[#allocation7 + $0x310] sm:$0xff]
    %v187 = vld [vmem:[#allocation7 + $0x318] sm:$0xff]
    %v188 = vld [vmem:[#allocation7 + $0x320] sm:$0xff]
    %v189 = vld [vmem:[#allocation7 + $0x328] sm:$0xff]
    %v190 = vld [vmem:[#allocation7 + $0x330] sm:$0xff]
    %v191 = vld [vmem:[#allocation7 + $0x338] sm:$0xff]
    %v192 = vld [vmem:[#allocation7 + $0x340] sm:$0xff]
    %v193 = vld [vmem:[#allocation7 + $0x348] sm:$0xff]
    %v194 = vld [vmem:[#allocation7 + $0x350] sm:$0xff]
    %v195 = vld [vmem:[#allocation7 + $0x358] sm:$0xff]
    %v196 = vld [vmem:[#allocation7 + $0x360] sm:$0xff]
    %v197 = vld [vmem:[#allocation7 + $0x368] sm:$0xff]
    %v198 = vld [vmem:[#allocation7 + $0x370] sm:$0xff]
    %v199 = vld [vmem:[#allocation7 + $0x378] sm:$0xff]
    %v200 = vld [vmem:[#allocation7 + $0x380] sm:$0xff]
    %v201 = vld [vmem:[#allocation7 + $0x388] sm:$0xff]
    %v202 = vld [vmem:[#allocation7 + $0x390] sm:$0xff]
    %v203 = vld [vmem:[#allocation7 + $0x398] sm:$0xff]
    %v204 = vld [vmem:[#allocation7 + $0x3a0] sm:$0xff]
    %v205 = vld [vmem:[#allocation7 + $0x3a8] sm:$0xff]
    %v206 = vld [vmem:[#allocation7 + $0x3b0] sm:$0xff]
    %v207 = vld [vmem:[#allocation7 + $0x3b8] sm:$0xff]
    %v208 = vld [vmem:[#allocation7 + $0x3c0] sm:$0xff]
    %v209 = vld [vmem:[#allocation7 + $0x3c8] sm:$0xff]
    %v210 = vld [vmem:[#allocation7 + $0x3d0] sm:$0xff]
    %v211 = vld [vmem:[#allocation7 + $0x3d8] sm:$0xff]
    %v212 = vld [vmem:[#allocation7 + $0x3e0] sm:$0xff]
    %v213 = vld [vmem:[#allocation7 + $0x3e8] sm:$0xff]
    %v214 = vld [vmem:[#allocation7 + $0x3f0] sm:$0xff]
    %v215 = vld [vmem:[#allocation7 + $0x3f8] sm:$0xff]
    %v216 = vld [vmem:[%s5] sm:$0xf]
    %v218 = vlaneseq
    %v219 = vshrl.u32 %v218, 7
    %v220 = vsub.s32 0, %v219
    %v221 = vrot.slane %v216, %v220
    %v222 = vlaneseq
    %v223 = vshrl.u32 %v222, 7
    %v224 = vsub.s32 1, %v223
    %v225 = vrot.slane %v216, %v224
    %v226 = vlaneseq
    %v227 = vshrl.u32 %v226, 7
    %v228 = vsub.s32 2, %v227
    %v229 = vrot.slane %v216, %v228
    %v230 = vlaneseq
    %v231 = vshrl.u32 %v230, 7
    %v232 = vsub.s32 3, %v231
    %v233 = vrot.slane %v216, %v232
    %238 = vmatprep.subr.mxu0 %v149
    %239 = vmatpush1.msra.mxu0 %v148
    %240 = vmatprep.subr.mxu0 %v145
    %241 = vmatpush1.msra.mxu0 %v144
    %242 = vmatprep.subr.mxu0 %v141
    %243 = vmatpush1.msra.mxu0 %v140
    %244 = vmatprep.subr.mxu0 %v137
    %245 = vmatpush1.msra.mxu0 %v136
    %246 = vmatprep.subr.mxu0 %v133
    %247 = vmatpush1.msra.mxu0 %v132
    %248 = vmatprep.subr.mxu0 %v129
    %249 = vmatpush1.msra.mxu0 %v128
    %250 = vmatprep.subr.mxu0 %v125
    %251 = vmatpush1.msra.mxu0 %v124
    %252 = vmatprep.subr.mxu0 %v121
    %253 = vmatpush1.msra.mxu0 %v120
    %254 = vmatprep.subr.mxu0 %v117
    %255 = vmatpush1.msra.mxu0 %v116
    %256 = vmatprep.subr.mxu0 %v113
    %257 = vmatpush1.msra.mxu0 %v112
    %258 = vmatprep.subr.mxu0 %v109
    %259 = vmatpush1.msra.mxu0 %v108
    %260 = vmatprep.subr.mxu0 %v105
    %261 = vmatpush1.msra.mxu0 %v104
    %262 = vmatprep.subr.mxu0 %v101
    %263 = vmatpush1.msra.mxu0 %v100
    %264 = vmatprep.subr.mxu0 %v97
    %265 = vmatpush1.msra.mxu0 %v96
    %266 = vmatprep.subr.mxu0 %v93
    %267 = vmatpush1.msra.mxu0 %v92
    %268 = vmatprep.subr.mxu0 %v89
    %269 = vmatpush1.msra.mxu0 %v88
    %270 = vmatprep.subr.mxu0 %v213
    %271 = vmatpush2.msra.mxu0 %v212
    %272 = vmatprep.subr.mxu0 %v209
    %273 = vmatpush2.msra.mxu0 %v208
    %274 = vmatprep.subr.mxu0 %v205
    %275 = vmatpush2.msra.mxu0 %v204
    %276 = vmatprep.subr.mxu0 %v201
    %277 = vmatpush2.msra.mxu0 %v200
    %278 = vmatprep.subr.mxu0 %v197
    %279 = vmatpush2.msra.mxu0 %v196
    %280 = vmatprep.subr.mxu0 %v193
    %281 = vmatpush2.msra.mxu0 %v192
    %282 = vmatprep.subr.mxu0 %v189
    %283 = vmatpush2.msra.mxu0 %v188
    %284 = vmatprep.subr.mxu0 %v185
    %285 = vmatpush2.msra.mxu0 %v184
    %286 = vmatprep.subr.mxu0 %v181
    %287 = vmatpush2.msra.mxu0 %v180
    %288 = vmatprep.subr.mxu0 %v177
    %289 = vmatpush2.msra.mxu0 %v176
    %290 = vmatprep.subr.mxu0 %v173
    %291 = vmatpush2.msra.mxu0 %v172
    %292 = vmatprep.subr.mxu0 %v169
    %293 = vmatpush2.msra.mxu0 %v168
    %294 = vmatprep.subr.mxu0 %v165
    %295 = vmatpush2.msra.mxu0 %v164
    %296 = vmatprep.subr.mxu0 %v161
    %297 = vmatpush2.msra.mxu0 %v160
    %298 = vmatprep.subr.mxu0 %v157
    %299 = vmatpush2.msra.mxu0 %v156
    %300 = vmatprep.subr.mxu0 %v153
    %301 = vmatpush2.msra.mxu0 %v152
    %302 = vmatprep.mubr.f32.mxu0 %v86
    %303 = vmatmul.mubr.f32.gmra.mxu0 %v85
    %v304 = vpop.f32.mrf.mxu0
    %v305 = vadd.f32 %v221, %v304
    %v306 = vpop.f32.mrf.mxu0
    %v307 = vadd.f32 %v225, %v306
    %308 = vdwg.mxu0
    %309 = vmatprep.subr.mxu0 %v151
    %310 = vmatpush1.msra.mxu0 %v150
    %311 = vmatprep.subr.mxu0 %v147
    %312 = vmatpush1.msra.mxu0 %v146
    %313 = vmatprep.subr.mxu0 %v143
    %314 = vmatpush1.msra.mxu0 %v142
    %315 = vmatprep.subr.mxu0 %v139
    %316 = vmatpush1.msra.mxu0 %v138
    %317 = vmatprep.subr.mxu0 %v135
    %318 = vmatpush1.msra.mxu0 %v134
    %319 = vmatprep.subr.mxu0 %v131
    %320 = vmatpush1.msra.mxu0 %v130
    %321 = vmatprep.subr.mxu0 %v127
    %322 = vmatpush1.msra.mxu0 %v126
    %323 = vmatprep.subr.mxu0 %v123
    %324 = vmatpush1.msra.mxu0 %v122
    %325 = vmatprep.subr.mxu0 %v119
    %326 = vmatpush1.msra.mxu0 %v118
    %327 = vmatprep.subr.mxu0 %v115
    %328 = vmatpush1.msra.mxu0 %v114
    %329 = vmatprep.subr.mxu0 %v111
    %330 = vmatpush1.msra.mxu0 %v110
    %331 = vmatprep.subr.mxu0 %v107
    %332 = vmatpush1.msra.mxu0 %v106
    %333 = vmatprep.subr.mxu0 %v103
    %334 = vmatpush1.msra.mxu0 %v102
    %335 = vmatprep.subr.mxu0 %v99
    %336 = vmatpush1.msra.mxu0 %v98
    %337 = vmatprep.subr.mxu0 %v95
    %338 = vmatpush1.msra.mxu0 %v94
    %339 = vmatprep.subr.mxu0 %v91
    %340 = vmatpush1.msra.mxu0 %v90
    %341 = vmatprep.subr.mxu0 %v215
    %342 = vmatpush2.msra.mxu0 %v214
    %343 = vmatprep.subr.mxu0 %v211
    %344 = vmatpush2.msra.mxu0 %v210
    %345 = vmatprep.subr.mxu0 %v207
    %346 = vmatpush2.msra.mxu0 %v206
    %347 = vmatprep.subr.mxu0 %v203
    %348 = vmatpush2.msra.mxu0 %v202
    %349 = vmatprep.subr.mxu0 %v199
    %350 = vmatpush2.msra.mxu0 %v198
    %351 = vmatprep.subr.mxu0 %v195
    %352 = vmatpush2.msra.mxu0 %v194
    %353 = vmatprep.subr.mxu0 %v191
    %354 = vmatpush2.msra.mxu0 %v190
    %355 = vmatprep.subr.mxu0 %v187
    %356 = vmatpush2.msra.mxu0 %v186
    %357 = vmatprep.subr.mxu0 %v183
    %358 = vmatpush2.msra.mxu0 %v182
    %359 = vmatprep.subr.mxu0 %v179
    %360 = vmatpush2.msra.mxu0 %v178
    %361 = vmatprep.subr.mxu0 %v175
    %362 = vmatpush2.msra.mxu0 %v174
    %363 = vmatprep.subr.mxu0 %v171
    %364 = vmatpush2.msra.mxu0 %v170
    %365 = vmatprep.subr.mxu0 %v167
    %366 = vmatpush2.msra.mxu0 %v166
    %367 = vmatprep.subr.mxu0 %v163
    %368 = vmatpush2.msra.mxu0 %v162
    %369 = vmatprep.subr.mxu0 %v159
    %370 = vmatpush2.msra.mxu0 %v158
    %371 = vmatprep.subr.mxu0 %v155
    %372 = vmatpush2.msra.mxu0 %v154
    %373 = vmatprep.mubr.f32.mxu0 %v86
    %374 = vmatmul.mubr.f32.gmra.mxu0 %v85
    %v375 = vpop.f32.mrf.mxu0
    %v376 = vadd.f32 %v229, %v375
    %v377 = vpop.f32.mrf.mxu0
    %v378 = vadd.f32 %v233, %v377
    %379 = vdwg.mxu0
    %v380 = vxor.u32 %v305, 2147483648
    %v381 = vmul.f32 %v380, 1.442695
    %v382 = vpow.pop %v381
    %v383 = vadd.f32 %v382, 1.0
    %v384 = vrcp.pop %v383
    %v385 = vmul.f32 1.0, %v384
    %v386 = vxor.u32 %v307, 2147483648
    %v387 = vmul.f32 %v386, 1.442695
    %v388 = vpow.pop %v387
    %v389 = vadd.f32 %v388, 1.0
    %v390 = vrcp.pop %v389
    %v391 = vmul.f32 1.0, %v390
    %v392 = vtanh.pop %v376
    %v393 = vxor.u32 %v378, 2147483648
    %v394 = vmul.f32 %v393, 1.442695
    %v395 = vpow.pop %v394
    %v396 = vadd.f32 %v395, 1.0
    %v397 = vrcp.pop %v396
    %v398 = vmul.f32 1.0, %v397
    %v399 = vmul.f32 %v391, %v87
    %v400 = vmul.f32 %v385, %v392
    %v401 = vadd.f32 %v399, %v400
    %v402 = vtanh.pop %v401
    %v403 = vmul.f32 %v398, %v402
    %404 = vst [vmem:[#allocation11] sm:$0x1] %v403
    %405 = vst [vmem:[#allocation13] sm:$0x1] %v401
    %v406 = vld [vmem:[#allocation9] sm:$0xff]
    %v407 = vld [vmem:[#allocation9 + $0x8] sm:$0xff]
    %v408 = vld [vmem:[#allocation9 + $0x10] sm:$0xff]
    %v409 = vld [vmem:[#allocation9 + $0x18] sm:$0xff]
    %v410 = vld [vmem:[#allocation9 + $0x20] sm:$0xff]
    %v411 = vld [vmem:[#allocation9 + $0x28] sm:$0xff]
    %v412 = vld [vmem:[#allocation9 + $0x30] sm:$0xff]
    %v413 = vld [vmem:[#allocation9 + $0x38] sm:$0xff]
    %v414 = vld [vmem:[#allocation9 + $0x40] sm:$0xff]
    %v415 = vld [vmem:[#allocation9 + $0x48] sm:$0xff]
    %v416 = vld [vmem:[#allocation9 + $0x50] sm:$0xff]
    %v417 = vld [vmem:[#allocation9 + $0x58] sm:$0xff]
    %v418 = vld [vmem:[#allocation9 + $0x60] sm:$0xff]
    %v419 = vld [vmem:[#allocation9 + $0x68] sm:$0xff]
    %v420 = vld [vmem:[#allocation9 + $0x70] sm:$0xff]
    %v421 = vld [vmem:[#allocation9 + $0x78] sm:$0xff]
    %v422 = vld [vmem:[%s7] sm:$0x1]
    %423 = vmatprep.subr.mxu0 0.0
    %424 = vmatpush1.msra.mxu0 %v421
    %425 = vmatprep.subr.mxu0 0.0
    %426 = vmatpush1.msra.mxu0 %v420
    %427 = vmatprep.subr.mxu0 0.0
    %428 = vmatpush1.msra.mxu0 %v419
    %429 = vmatprep.subr.mxu0 0.0
    %430 = vmatpush1.msra.mxu0 %v418
    %431 = vmatprep.subr.mxu0 0.0
    %432 = vmatpush1.msra.mxu0 %v417
    %433 = vmatprep.subr.mxu0 0.0
    %434 = vmatpush1.msra.mxu0 %v416
    %435 = vmatprep.subr.mxu0 0.0
    %436 = vmatpush1.msra.mxu0 %v415
    %437 = vmatprep.subr.mxu0 0.0
    %438 = vmatpush1.msra.mxu0 %v414
    %439 = vmatprep.subr.mxu0 0.0
    %440 = vmatpush1.msra.mxu0 %v413
    %441 = vmatprep.subr.mxu0 0.0
    %442 = vmatpush1.msra.mxu0 %v412
    %443 = vmatprep.subr.mxu0 0.0
    %444 = vmatpush1.msra.mxu0 %v411
    %445 = vmatprep.subr.mxu0 0.0
    %446 = vmatpush1.msra.mxu0 %v410
    %447 = vmatprep.subr.mxu0 0.0
    %448 = vmatpush1.msra.mxu0 %v409
    %449 = vmatprep.subr.mxu0 0.0
    %450 = vmatpush1.msra.mxu0 %v408
    %451 = vmatprep.subr.mxu0 0.0
    %452 = vmatpush1.msra.mxu0 %v407
    %453 = vmatprep.subr.mxu0 0.0
    %454 = vmatpush1.msra.mxu0 %v406
    %455 = vmatprep.subr.mxu0 0.0
    %456 = vmatpush2.msra.mxu0 0.0
    %457 = vmatprep.subr.mxu0 0.0
    %458 = vmatpush2.msra.mxu0 0.0
    %459 = vmatprep.subr.mxu0 0.0
    %460 = vmatpush2.msra.mxu0 0.0
    %461 = vmatprep.subr.mxu0 0.0
    %462 = vmatpush2.msra.mxu0 0.0
    %463 = vmatprep.subr.mxu0 0.0
    %464 = vmatpush2.msra.mxu0 0.0
    %465 = vmatprep.subr.mxu0 0.0
    %466 = vmatpush2.msra.mxu0 0.0
    %467 = vmatprep.subr.mxu0 0.0
    %468 = vmatpush2.msra.mxu0 0.0
    %469 = vmatprep.subr.mxu0 0.0
    %470 = vmatpush2.msra.mxu0 0.0
    %471 = vmatprep.subr.mxu0 0.0
    %472 = vmatpush2.msra.mxu0 0.0
    %473 = vmatprep.subr.mxu0 0.0
    %474 = vmatpush2.msra.mxu0 0.0
    %475 = vmatprep.subr.mxu0 0.0
    %476 = vmatpush2.msra.mxu0 0.0
    %477 = vmatprep.subr.mxu0 0.0
    %478 = vmatpush2.msra.mxu0 0.0
    %479 = vmatprep.subr.mxu0 0.0
    %480 = vmatpush2.msra.mxu0 0.0
    %481 = vmatprep.subr.mxu0 0.0
    %482 = vmatpush2.msra.mxu0 0.0
    %483 = vmatprep.subr.mxu0 0.0
    %484 = vmatpush2.msra.mxu0 0.0
    %485 = vmatprep.subr.mxu0 0.0
    %486 = vmatpush2.msra.mxu0 0.0
    %487 = vmatprep.mubr.f32.mxu0 0.0
    %488 = vmatmul.mubr.f32.gmra.mxu0 %v85
    %v489 = vpop.f32.mrf.mxu0
    %v490 = vadd.f32 %v422, %v489
    %v491 = vpop.f32.mrf.mxu0
    %492 = vdwg.mxu0
    %vm493 = vcmask 1040384
    %v494 = vsel %vm493, %v490, -inf
    %495 = vmax.xlane.f32.xlu0 %v494
    %v496 = vpop.xlane.xlu0 %495
    %v497 = vsub.f32 %v490, %v496
    %v498 = vmul.f32 %v497, 1.442695
    %v499 = vpow.pop %v498
    %v500 = vsel %vm493, %v499, 0.0
    %501 = vadd.xlane.f32.xlu0 %v500
    %v502 = vpop.xlane.xlu0 %501
    %v503 = vlog2.pop %v502
    %v504 = vmul.f32 %v503, 0.6931472
    %v505 = vsub.f32 %v497, %v504
    %506 = vst [vmem:[#allocation10] sm:$0x1] %v505
    // Predicated region
    $region46: #{tpu_custom_call.1} parent=1 // pred_check
      _
    $region47: #{tpu_custom_call.1} parent=1 // pred_check_branch
      %508 = sbr.rel (0) target = $region49
    $region48: #{tpu_custom_call.1} parent=1 // pred_region
      %s510 = ssub.s32 16, 16
      %511 = vsyncadd [#allocation6], %s510
      %s513 = sshll.u32 [#allocation10], 4
      %s514 = int_to_ptr.vmem [resolvable:$true] %s513
      %516 = dma.vmem_to_hbm [thread:$0]  %s514, 16, %s8, [#allocation6]
    $region49: #{tpu_custom_call.1} parent=1 // pred_fallthru
      _
    // Predicated region
    $region50: #{tpu_custom_call.1} parent=1 // pred_check
      _
    $region51: #{tpu_custom_call.1} parent=1 // pred_check_branch
      %518 = sbr.rel (0) target = $region53
    $region52: #{tpu_custom_call.1} parent=1 // pred_region
      %s520 = ssub.s32 16, 16
      %521 = vsyncadd [#allocation12], %s520
      %s523 = sshll.u32 [#allocation11], 4
      %s524 = int_to_ptr.vmem [resolvable:$true] %s523
      %526 = dma.vmem_to_hbm [thread:$0]  %s524, 16, %s9, [#allocation12]
    $region53: #{tpu_custom_call.1} parent=1 // pred_fallthru
      _
    // Predicated region
    $region54: #{tpu_custom_call.1} parent=1 // pred_check
      _
    $region55: #{tpu_custom_call.1} parent=1 // pred_check_branch
      %528 = sbr.rel (0) target = $region57
    $region56: #{tpu_custom_call.1} parent=1 // pred_region
      %s530 = ssub.s32 16, 16
      %531 = vsyncadd [#allocation12], %s530
      %s533 = sshll.u32 [#allocation13], 4
      %s534 = int_to_ptr.vmem [resolvable:$true] %s533
      %536 = dma.vmem_to_hbm [thread:$0]  %s534, 16, %s10, [#allocation12]
    $region57: #{tpu_custom_call.1} parent=1 // pred_fallthru
      _
    // Predicated region
    $region58: #{tpu_custom_call.1} parent=1 // pred_check
      _
    $region59: #{tpu_custom_call.1} parent=1 // pred_check_branch
      %538 = sbr.rel (0) target = $region61
    $region60: #{tpu_custom_call.1} parent=1 // pred_region
      %539 = dma.done [#allocation6], 16
    $region61: #{tpu_custom_call.1} parent=1 // pred_fallthru
      _
    // Predicated region
    $region62: #{tpu_custom_call.1} parent=1 // pred_check
      _
    $region63: #{tpu_custom_call.1} parent=1 // pred_check_branch
      %541 = sbr.rel (0) target = $region65
    $region64: #{tpu_custom_call.1} parent=1 // pred_region
      %542 = dma.done [#allocation12], 16
    $region65: #{tpu_custom_call.1} parent=1 // pred_fallthru
      _
    // Predicated region
    $region66: #{tpu_custom_call.1} parent=1 // pred_check
      _
    $region67: #{tpu_custom_call.1} parent=1 // pred_check_branch
      %544 = sbr.rel (0) target = $region69
    $region68: #{tpu_custom_call.1} parent=1 // pred_region
      %545 = dma.done [#allocation12], 16
    $region69: #{tpu_custom_call.1} parent=1 // pred_fallthru
      _
    %546 = vsyncpa [#allocation5], 1
    %547 = vsyncpa [#allocation8], 1
    %548 = vsyncpa [#allocation6], 1
    %549 = vsyncpa [#allocation12], 1

</llo_original>
